<compile_context>
chip_gen: v7x
topology: tpu7x:2x2x1
jax: 0.10.0
libtpu: 0.0.40
codegen_flags: <defaults>
</compile_context>

<pallas_src>
import jax
import jax.numpy as jnp
from jax.experimental import pallas as pl
from jax.experimental.pallas import tpu as pltpu

_MEAN = (0.485, 0.456, 0.406)
_STD = (0.229, 0.224, 0.225)
_LUMA = (0.299, 0.587, 0.114)  # torchvision rgb_to_grayscale weights


def _aug_kernel(gray_ref, perm_ref, x_ref, o1_ref, o2_ref):
    # gray_ref : SMEM int32[2]              -> grayscale flag per view
    # perm_ref : VMEM f32[2, W, W]          -> per-view flip/identity permutation
    #                                          (constant index_map => VMEM-resident)
    # x_ref    : VMEM f32[Bt, 3*H, W]       -> Bt images, channels stacked on rows
    # o1/o2    : VMEM f32[Bt, 3*H, W]       -> the two augmented views
    Bt, H3, W = x_ref.shape
    H = H3 // 3
    out_refs = (o1_ref, o2_ref)

    for v in range(2):
        gray_on = gray_ref[v] == 1          # read flag once per view
        perm = perm_ref[v]                  # (W, W) identity or anti-identity
        o_ref = out_refs[v]
        for i in range(Bt):
            xi = x_ref[i]                   # (3*H, W): all channels of image i
            # Horizontal flip (or identity) for all 3 channels in ONE matmul.
            y = jnp.dot(xi, perm, preferred_element_type=jnp.float32)
            r = y[0:H, :]
            g = y[H:2 * H, :]
            b = y[2 * H:3 * H, :]
            luma = _LUMA[0] * r + _LUMA[1] * g + _LUMA[2] * b
            chans = (r, g, b)
            for c in range(3):
                yc = jnp.where(gray_on, luma, chans[c])
                o_ref[i, c * H:(c + 1) * H, :] = (yc - _MEAN[c]) * (1.0 / _STD[c])


def _pick_block_b(B, bytes_per_img, target_bytes=2 << 20):
    """Largest divisor of B whose block is <= ~2 MiB, keeping >= 2 grid steps."""
    bb = max(1, min(B, target_bytes // max(bytes_per_img, 1)))
    while bb > 1 and (B % bb != 0 or B // bb < 2):
        bb -= 1
    return bb


def _perm_matrix(flip, W):
    """(W, W) f32: identity if flip == 0, anti-identity (horizontal flip) if 1."""
    r = jax.lax.broadcasted_iota(jnp.int32, (W, W), 0)
    c = jax.lax.broadcasted_iota(jnp.int32, (W, W), 1)
    ident = r == c
    anti = (r + c) == (W - 1)
    return jnp.where(flip == 1, anti, ident).astype(jnp.float32)


def _augment_pair(grays, perms, x):
    """x: (B, 3, H, W) f32; grays: int32[2]; perms: f32[2, W, W]."""
    B, C, H, W = x.shape
    assert C == 3, "Default_Augmentation expects RGB input"
    x_r = x.reshape(B, 3 * H, W)  # channels stacked along rows (free reshape in XLA)

    bytes_per_img = 3 * H * W * 4
    Bt = _pick_block_b(B, bytes_per_img)
    grid = (B // Bt,)

    o1, o2 = pl.pallas_call(
        _aug_kernel,
        out_shape=(
            jax.ShapeDtypeStruct((B, 3 * H, W), jnp.float32),
            jax.ShapeDtypeStruct((B, 3 * H, W), jnp.float32),
        ),
        grid_spec=pltpu.PrefetchScalarGridSpec(
            num_scalar_prefetch=1,
            grid=grid,
            in_specs=[
                # perm matrices: constant index_map -> DMA'd once, stays resident.
                pl.BlockSpec((2, W, W), lambda b, flags: (0, 0, 0)),
                pl.BlockSpec((Bt, 3 * H, W), lambda b, flags: (b, 0, 0)),
            ],
            out_specs=[
                pl.BlockSpec((Bt, 3 * H, W), lambda b, flags: (b, 0, 0)),
                pl.BlockSpec((Bt, 3 * H, W), lambda b, flags: (b, 0, 0)),
            ],
        ),
        compiler_params=pltpu.CompilerParams(
            dimension_semantics=("parallel",),
        ),
    )(grays, perms, x_r)

    return o1.reshape(B, 3, H, W), o2.reshape(B, 3, H, W)


def _draw_view_params(key):
    kf, kg = jax.random.split(key)
    flip = (jax.random.uniform(kf) < 0.5).astype(jnp.int32)  # RandomHorizontalFlip p=0.5
    gray = (jax.random.uniform(kg) < 0.2).astype(jnp.int32)  # RandomGrayscale p=0.2
    return flip, gray


def default_augmentation(x, key):
    """Returns (image_one, image_two): two independently augmented views of x."""
    x = x.astype(jnp.float32)
    B, C, H, W = x.shape
    k1, k2 = jax.random.split(key)
    f1, g1 = _draw_view_params(k1)
    f2, g2 = _draw_view_params(k2)
    perms = jnp.stack([_perm_matrix(f1, W), _perm_matrix(f2, W)])
    grays = jnp.stack([g1, g2]).astype(jnp.int32)
    return _augment_pair(grays, perms, x)


def _ref_view(x, flip, gray):
    """Pure-JAX reference: flip -> grayscale -> normalize."""
    y = jnp.where(flip == 1, jnp.flip(x, axis=-1), x)
    luma = _LUMA[0] * y[:, 0] + _LUMA[1] * y[:, 1] + _LUMA[2] * y[:, 2]
    y = jnp.where(gray == 1, luma[:, None, :, :], y)
    mean = jnp.array(_MEAN, jnp.float32).reshape(1, 3, 1, 1)
    std = jnp.array(_STD, jnp.float32).reshape(1, 3, 1, 1)
    return (y - mean) / std


if __name__ == "__main__":
    key = jax.random.PRNGKey(0)
    kx, kaug = jax.random.split(key)
    # Small image batch: B=2, C=3 (RGB required by the transform), H=W=16.
    x = jax.random.uniform(kx, (2, 3, 16, 16), dtype=jnp.float32)

    image_one, image_two = default_augmentation(x, kaug)
    jax.block_until_ready(image_one)
    jax.block_until_ready(image_two)

    assert image_one.shape == x.shape and image_two.shape == x.shape
    assert image_one.dtype == jnp.float32 and image_two.dtype == jnp.float32

    # Correctness check against a pure-JAX reference with the same random draws.
    k1, k2 = jax.random.split(kaug)
    f1, g1 = _draw_view_params(k1)
    f2, g2 = _draw_view_params(k2)
    ref_one = _ref_view(x, f1, g1)
    ref_two = _ref_view(x, f2, g2)
    assert jnp.allclose(image_one, ref_one, rtol=1e-5, atol=1e-5)
    assert jnp.allclose(image_two, ref_two, rtol=1e-5, atol=1e-5)

    print("KERNEL_OK")
</pallas_src>

<mosaic_0001>
module attributes {stable_mosaic.version = 11 : i64} {
  func.func @_aug_kernel(%arg0: i32, %arg1: memref<2xi32, #tpu.memory_space<smem>>, %arg2: memref<2x16x16xf32, #tpu.memory_space<vmem>>, %arg3: memref<1x48x16xf32, #tpu.memory_space<vmem>>, %arg4: memref<1x48x16xf32, #tpu.memory_space<vmem>>, %arg5: memref<1x48x16xf32, #tpu.memory_space<vmem>>) attributes {dimension_semantics = [#tpu.dimension_semantics<parallel>], iteration_bounds = array<i64: 2>, scalar_prefetch = 1 : i64, scratch_operands = 0 : i64, tpu.core_type = #tpu.core_type<tc>, window_params = [{pipeline_mode = #tpu.pipeline_mode<synchronous>, transform_indices = @transform_0, window_bounds = array<i64: 2, 16, 16>}, {transform_indices = @transform_1, window_bounds = array<i64: 1, 48, 16>}, {transform_indices = @transform_2, window_bounds = array<i64: 1, 48, 16>}, {transform_indices = @transform_3, window_bounds = array<i64: 1, 48, 16>}]} {
    %c0 = arith.constant 0 : index
    %0 = memref.load %arg1[%c0] : memref<2xi32, #tpu.memory_space<smem>>
    %c1_i32 = arith.constant 1 : i32
    %1 = arith.cmpi eq, %0, %c1_i32 : i32
    %c0_0 = arith.constant 0 : index
    %c0_1 = arith.constant 0 : index
    %c0_2 = arith.constant 0 : index
    %2 = vector.load %arg2[%c0_0, %c0_1, %c0_2] : memref<2x16x16xf32, #tpu.memory_space<vmem>>, vector<1x16x16xf32>
    %3 = vector.shape_cast %2 : vector<1x16x16xf32> to vector<16x16xf32>
    %c0_3 = arith.constant 0 : index
    %c0_4 = arith.constant 0 : index
    %c0_5 = arith.constant 0 : index
    %4 = vector.load %arg3[%c0_3, %c0_4, %c0_5] : memref<1x48x16xf32, #tpu.memory_space<vmem>>, vector<1x48x16xf32>
    %5 = vector.shape_cast %4 : vector<1x48x16xf32> to vector<48x16xf32>
    %cst = arith.constant dense<0.000000e+00> : vector<48x16xf32>
    %6 = tpu.matmul %5, %3, %cst {dimension_numbers = #tpu.dot_dimension_numbers<[1], [0], [0], [1], [0, 0, 1, 1], [], []>} : vector<48x16xf32>, vector<16x16xf32>, vector<48x16xf32> -> vector<48x16xf32>
    %7 = vector.extract_strided_slice %6 {offsets = [0, 0], sizes = [16, 16], strides = [1, 1]} : vector<48x16xf32> to vector<16x16xf32>
    %8 = vector.extract_strided_slice %6 {offsets = [16, 0], sizes = [16, 16], strides = [1, 1]} : vector<48x16xf32> to vector<16x16xf32>
    %9 = vector.extract_strided_slice %6 {offsets = [32, 0], sizes = [16, 16], strides = [1, 1]} : vector<48x16xf32> to vector<16x16xf32>
    %cst_6 = arith.constant 2.990000e-01 : f32
    %10 = vector.broadcast %cst_6 : f32 to vector<16x16xf32>
    %11 = arith.mulf %10, %7 : vector<16x16xf32>
    %cst_7 = arith.constant 5.870000e-01 : f32
    %12 = vector.broadcast %cst_7 : f32 to vector<16x16xf32>
    %13 = arith.mulf %12, %8 : vector<16x16xf32>
    %14 = arith.addf %11, %13 : vector<16x16xf32>
    %cst_8 = arith.constant 1.140000e-01 : f32
    %15 = vector.broadcast %cst_8 : f32 to vector<16x16xf32>
    %16 = arith.mulf %15, %9 : vector<16x16xf32>
    %17 = arith.addf %14, %16 : vector<16x16xf32>
    %18 = arith.select %1, %17, %7 : vector<16x16xf32>
    %cst_9 = arith.constant 4.850000e-01 : f32
    %19 = vector.broadcast %cst_9 : f32 to vector<16x16xf32>
    %20 = arith.subf %18, %19 : vector<16x16xf32>
    %cst_10 = arith.constant 4.36681223 : f32
    %21 = vector.broadcast %cst_10 : f32 to vector<16x16xf32>
    %22 = arith.mulf %20, %21 : vector<16x16xf32>
    %c0_11 = arith.constant 0 : index
    %c0_12 = arith.constant 0 : index
    %c0_13 = arith.constant 0 : index
    %23 = vector.load %arg4[%c0_11, %c0_12, %c0_13] : memref<1x48x16xf32, #tpu.memory_space<vmem>>, vector<1x16x16xf32>
    %24 = vector.shape_cast %23 : vector<1x16x16xf32> to vector<16x16xf32>
    %25 = vector.shape_cast %22 : vector<16x16xf32> to vector<1x16x16xf32>
    tpu.vector_store %arg4[%c0_11, %c0_12, %c0_13], %25 {strides = array<i32>} : memref<1x48x16xf32, #tpu.memory_space<vmem>>, vector<1x16x16xf32>,
    %26 = arith.select %1, %17, %8 : vector<16x16xf32>
    %cst_14 = arith.constant 4.560000e-01 : f32
    %27 = vector.broadcast %cst_14 : f32 to vector<16x16xf32>
    %28 = arith.subf %26, %27 : vector<16x16xf32>
    %cst_15 = arith.constant 4.46428585 : f32
    %29 = vector.broadcast %cst_15 : f32 to vector<16x16xf32>
    %30 = arith.mulf %28, %29 : vector<16x16xf32>
    %c0_16 = arith.constant 0 : index
    %c16 = arith.constant 16 : index
    %c0_17 = arith.constant 0 : index
    %31 = vector.load %arg4[%c0_16, %c16, %c0_17] : memref<1x48x16xf32, #tpu.memory_space<vmem>>, vector<1x16x16xf32>
    %32 = vector.shape_cast %31 : vector<1x16x16xf32> to vector<16x16xf32>
    %33 = vector.shape_cast %30 : vector<16x16xf32> to vector<1x16x16xf32>
    tpu.vector_store %arg4[%c0_16, %c16, %c0_17], %33 {strides = array<i32>} : memref<1x48x16xf32, #tpu.memory_space<vmem>>, vector<1x16x16xf32>,
    %34 = arith.select %1, %17, %9 : vector<16x16xf32>
    %cst_18 = arith.constant 4.060000e-01 : f32
    %35 = vector.broadcast %cst_18 : f32 to vector<16x16xf32>
    %36 = arith.subf %34, %35 : vector<16x16xf32>
    %cst_19 = arith.constant 4.44444466 : f32
    %37 = vector.broadcast %cst_19 : f32 to vector<16x16xf32>
    %38 = arith.mulf %36, %37 : vector<16x16xf32>
    %c0_20 = arith.constant 0 : index
    %c32 = arith.constant 32 : index
    %c0_21 = arith.constant 0 : index
    %39 = vector.load %arg4[%c0_20, %c32, %c0_21] : memref<1x48x16xf32, #tpu.memory_space<vmem>>, vector<1x16x16xf32>
    %40 = vector.shape_cast %39 : vector<1x16x16xf32> to vector<16x16xf32>
    %41 = vector.shape_cast %38 : vector<16x16xf32> to vector<1x16x16xf32>
    tpu.vector_store %arg4[%c0_20, %c32, %c0_21], %41 {strides = array<i32>} : memref<1x48x16xf32, #tpu.memory_space<vmem>>, vector<1x16x16xf32>,
    %c1 = arith.constant 1 : index
    %42 = memref.load %arg1[%c1] : memref<2xi32, #tpu.memory_space<smem>>
    %c1_i32_22 = arith.constant 1 : i32
    %43 = arith.cmpi eq, %42, %c1_i32_22 : i32
    %c1_23 = arith.constant 1 : index
    %c0_24 = arith.constant 0 : index
    %c0_25 = arith.constant 0 : index
    %44 = vector.load %arg2[%c1_23, %c0_24, %c0_25] : memref<2x16x16xf32, #tpu.memory_space<vmem>>, vector<1x16x16xf32>
    %45 = vector.shape_cast %44 : vector<1x16x16xf32> to vector<16x16xf32>
    %c0_26 = arith.constant 0 : index
    %c0_27 = arith.constant 0 : index
    %c0_28 = arith.constant 0 : index
    %46 = vector.load %arg3[%c0_26, %c0_27, %c0_28] : memref<1x48x16xf32, #tpu.memory_space<vmem>>, vector<1x48x16xf32>
    %47 = vector.shape_cast %46 : vector<1x48x16xf32> to vector<48x16xf32>
    %cst_29 = arith.constant dense<0.000000e+00> : vector<48x16xf32>
    %48 = tpu.matmul %47, %45, %cst_29 {dimension_numbers = #tpu.dot_dimension_numbers<[1], [0], [0], [1], [0, 0, 1, 1], [], []>} : vector<48x16xf32>, vector<16x16xf32>, vector<48x16xf32> -> vector<48x16xf32>
    %49 = vector.extract_strided_slice %48 {offsets = [0, 0], sizes = [16, 16], strides = [1, 1]} : vector<48x16xf32> to vector<16x16xf32>
    %50 = vector.extract_strided_slice %48 {offsets = [16, 0], sizes = [16, 16], strides = [1, 1]} : vector<48x16xf32> to vector<16x16xf32>
    %51 = vector.extract_strided_slice %48 {offsets = [32, 0], sizes = [16, 16], strides = [1, 1]} : vector<48x16xf32> to vector<16x16xf32>
    %cst_30 = arith.constant 2.990000e-01 : f32
    %52 = vector.broadcast %cst_30 : f32 to vector<16x16xf32>
    %53 = arith.mulf %52, %49 : vector<16x16xf32>
    %cst_31 = arith.constant 5.870000e-01 : f32
    %54 = vector.broadcast %cst_31 : f32 to vector<16x16xf32>
    %55 = arith.mulf %54, %50 : vector<16x16xf32>
    %56 = arith.addf %53, %55 : vector<16x16xf32>
    %cst_32 = arith.constant 1.140000e-01 : f32
    %57 = vector.broadcast %cst_32 : f32 to vector<16x16xf32>
    %58 = arith.mulf %57, %51 : vector<16x16xf32>
    %59 = arith.addf %56, %58 : vector<16x16xf32>
    %60 = arith.select %43, %59, %49 : vector<16x16xf32>
    %cst_33 = arith.constant 4.850000e-01 : f32
    %61 = vector.broadcast %cst_33 : f32 to vector<16x16xf32>
    %62 = arith.subf %60, %61 : vector<16x16xf32>
    %cst_34 = arith.constant 4.36681223 : f32
    %63 = vector.broadcast %cst_34 : f32 to vector<16x16xf32>
    %64 = arith.mulf %62, %63 : vector<16x16xf32>
    %c0_35 = arith.constant 0 : index
    %c0_36 = arith.constant 0 : index
    %c0_37 = arith.constant 0 : index
    %65 = vector.load %arg5[%c0_35, %c0_36, %c0_37] : memref<1x48x16xf32, #tpu.memory_space<vmem>>, vector<1x16x16xf32>
    %66 = vector.shape_cast %65 : vector<1x16x16xf32> to vector<16x16xf32>
    %67 = vector.shape_cast %64 : vector<16x16xf32> to vector<1x16x16xf32>
    tpu.vector_store %arg5[%c0_35, %c0_36, %c0_37], %67 {strides = array<i32>} : memref<1x48x16xf32, #tpu.memory_space<vmem>>, vector<1x16x16xf32>,
    %68 = arith.select %43, %59, %50 : vector<16x16xf32>
    %cst_38 = arith.constant 4.560000e-01 : f32
    %69 = vector.broadcast %cst_38 : f32 to vector<16x16xf32>
    %70 = arith.subf %68, %69 : vector<16x16xf32>
    %cst_39 = arith.constant 4.46428585 : f32
    %71 = vector.broadcast %cst_39 : f32 to vector<16x16xf32>
    %72 = arith.mulf %70, %71 : vector<16x16xf32>
    %c0_40 = arith.constant 0 : index
    %c16_41 = arith.constant 16 : index
    %c0_42 = arith.constant 0 : index
    %73 = vector.load %arg5[%c0_40, %c16_41, %c0_42] : memref<1x48x16xf32, #tpu.memory_space<vmem>>, vector<1x16x16xf32>
    %74 = vector.shape_cast %73 : vector<1x16x16xf32> to vector<16x16xf32>
    %75 = vector.shape_cast %72 : vector<16x16xf32> to vector<1x16x16xf32>
    tpu.vector_store %arg5[%c0_40, %c16_41, %c0_42], %75 {strides = array<i32>} : memref<1x48x16xf32, #tpu.memory_space<vmem>>, vector<1x16x16xf32>,
    %76 = arith.select %43, %59, %51 : vector<16x16xf32>
    %cst_43 = arith.constant 4.060000e-01 : f32
    %77 = vector.broadcast %cst_43 : f32 to vector<16x16xf32>
    %78 = arith.subf %76, %77 : vector<16x16xf32>
    %cst_44 = arith.constant 4.44444466 : f32
    %79 = vector.broadcast %cst_44 : f32 to vector<16x16xf32>
    %80 = arith.mulf %78, %79 : vector<16x16xf32>
    %c0_45 = arith.constant 0 : index
    %c32_46 = arith.constant 32 : index
    %c0_47 = arith.constant 0 : index
    %81 = vector.load %arg5[%c0_45, %c32_46, %c0_47] : memref<1x48x16xf32, #tpu.memory_space<vmem>>, vector<1x16x16xf32>
    %82 = vector.shape_cast %81 : vector<1x16x16xf32> to vector<16x16xf32>
    %83 = vector.shape_cast %80 : vector<16x16xf32> to vector<1x16x16xf32>
    tpu.vector_store %arg5[%c0_45, %c32_46, %c0_47], %83 {strides = array<i32>} : memref<1x48x16xf32, #tpu.memory_space<vmem>>, vector<1x16x16xf32>,
    return
  }
  func.func @transform_0(%arg0: i32, %arg1: memref<2xi32, #tpu.memory_space<smem>>) -> (i32, i32, i32) {
    %c0_i32 = arith.constant 0 : i32
    %c0_i32_0 = arith.constant 0 : i32
    %c0_i32_1 = arith.constant 0 : i32
    %c0_i32_2 = arith.constant 0 : i32
    return %c0_i32, %c0_i32_0, %c0_i32_1 : i32, i32, i32
  }
  func.func @transform_1(%arg0: i32, %arg1: memref<2xi32, #tpu.memory_space<smem>>) -> (i32, i32, i32) {
    %c0_i32 = arith.constant 0 : i32
    %c0_i32_0 = arith.constant 0 : i32
    %c0_i32_1 = arith.constant 0 : i32
    return %arg0, %c0_i32, %c0_i32_0 : i32, i32, i32
  }
  func.func @transform_2(%arg0: i32, %arg1: memref<2xi32, #tpu.memory_space<smem>>) -> (i32, i32, i32) {
    %c0_i32 = arith.constant 0 : i32
    %c0_i32_0 = arith.constant 0 : i32
    %c0_i32_1 = arith.constant 0 : i32
    return %arg0, %c0_i32, %c0_i32_0 : i32, i32, i32
  }
  func.func @transform_3(%arg0: i32, %arg1: memref<2xi32, #tpu.memory_space<smem>>) -> (i32, i32, i32) {
    %c0_i32 = arith.constant 0 : i32
    %c0_i32_0 = arith.constant 0 : i32
    %c0_i32_1 = arith.constant 0 : i32
    return %arg0, %c0_i32, %c0_i32_0 : i32, i32, i32
  }
}

</mosaic_0001>

<llo_original>
// kernel: tpu_custom_call.1
$region0: #{tpu_custom_call.1}
  #allocation0 [shape = 'u32[]', space=smem, size = 0x4, offset = 0x4, fixed_abs, tag = 'smem constant byte address 0x4 - core index']
  #allocation1 [shape = 'u32[144,128]{1,0:T(1,128)}', space=vmem, size = 0x12000, scoped, tag = 'internal scratch']
  #allocation2 [shape = 's32[1]{0}', space=sflag, size = 0x4, scoped, tag = 'scoped memory for tpu_custom_call.1']
  #allocation3 [shape = 'u8[512]{0}', space=smem, size = 0x200, scoped, tag = 'prefetched SMEM operand 0']
  %s0 = inlined_call_operand.vmem [shape: s32[2], index: 0, kind: input, shape index: {}]
  %s1 = inlined_call_operand.vmem [shape: f32[2,16,16], index: 1, kind: input, shape index: {}]
  %s2 = inlined_call_operand.vmem [shape: f32[2,48,16], index: 2, kind: input, shape index: {}]
  %s3 = inlined_call_operand.vmem [shape: f32[2,48,16], index: 3, kind: output, shape index: {0}]
  %s4 = inlined_call_operand.vmem [shape: f32[2,48,16], index: 4, kind: output, shape index: {1}]
  %5 = xla_tuple %s3, %s4
  %s6 = sld [smem:[#allocation0]]
  $region49: #{tpu_custom_call.1} parent=0
    _
  %s8 = ssub.s32 1, %s6
  %s9 = scalar_select 0, %s8, %s6
  %s10 = sshll.u32 %s0, 4
  %s11 = int_to_ptr.vmem [resolvable:$true] %s10
  %13 = dma.vmem_to_smem %s11, 16, [#allocation3], [#allocation2]
  %14 = dma.done [#allocation2], 16
  %15 = sfence
  loop: start=0, step=1, limit=4
  $region2: #{tpu_custom_call.1} parent=0 // loop_pre_header
    _
  $region3: #{tpu_custom_call.1} parent=0 // loop_header
    %s17 = sphi 0, %s21
    %p18 = scmp.ge.s32.totalorder %s17, 4
    %s25 = sphi 0, %s25
    %s27 = sphi 0, %s25
    %s28 = sphi 0, %s27
    %s42 = sphi 0, %s28
    %s48 = sphi 0, %s50
    %s51 = sphi 0, %s48
    %s52 = sphi 0, %s51
    %s68 = sphi 0, %s52
    %s74 = sphi 0, %s76
    %s77 = sphi 0, %s74
    %s78 = sphi 0, %s77
    %s94 = sphi 0, %s78
    %s100 = sphi 0, %s102
    %s103 = sphi 0, %s100
    %s104 = sphi 0, %s103
    %s120 = sphi 0, %s104
  $region4: #{tpu_custom_call.1} parent=0 // loop_header_branch
    %20 = sbr.rel (%p18) target = $region8
  $region5: #{tpu_custom_call.1} parent=0 // loop_body
    %s22 = ssub.s32 %s17, 1
    %s23 = ssub.s32 %s17, 2
    %s24 = sadd.s32 %s17, 1
    %s26 = sadd.s32 %s25, 1
    %p29 = scmp.eq.s32.totalorder %s17, 1
    %p30 = scmp.ne.s32.totalorder %s25, %s27
    %p31 = scmp.eq.s32.totalorder %s17, 0
    %p32 = por %p30, %p31
    %p33 = scmp.ne.s32.totalorder %s25, %s27
    %p34 = scmp.eq.s32.totalorder %s22, 1
    %p35 = por %p33, %p34
    %p36 = scmp.ne.s32.totalorder %s27, %s28
    %p37 = scmp.eq.s32.totalorder %s22, 0
    %p38 = por %p36, %p37
    %p39 = scmp.ne.s32.totalorder %s27, %s28
    %p40 = scmp.eq.s32.totalorder %s23, 1
    %p41 = por %p39, %p40
    %p43 = scmp.ne.s32.totalorder %s28, %s42
    %p44 = scmp.eq.s32.totalorder %s23, 0
    %p45 = por %p43, %p44
    %s46 = ssub.s32 %s17, %s24
    %p47 = scmp.eq.s32.totalorder %s46, 0
    %s49 = sadd.s32 %s48, 1
    %s50 = scalar_select %p47, %s48, %s49
    %p53 = pneg %p47
    %p54 = scmp.eq.s32.totalorder %s17, 1
    %p55 = por %p53, %p54
    %p56 = scmp.ne.s32.totalorder %s48, %s51
    %p57 = scmp.eq.s32.totalorder %s17, 0
    %p58 = por %p56, %p57
    %p59 = scmp.ne.s32.totalorder %s48, %s51
    %p60 = scmp.eq.s32.totalorder %s22, 1
    %p61 = por %p59, %p60
    %p62 = scmp.ne.s32.totalorder %s51, %s52
    %p63 = scmp.eq.s32.totalorder %s22, 0
    %p64 = por %p62, %p63
    %p65 = scmp.ne.s32.totalorder %s51, %s52
    %p66 = scmp.eq.s32.totalorder %s23, 1
    %p67 = por %p65, %p66
    %p69 = scmp.ne.s32.totalorder %s52, %s68
    %p70 = scmp.eq.s32.totalorder %s23, 0
    %p71 = por %p69, %p70
    %s72 = ssub.s32 %s17, %s24
    %p73 = scmp.eq.s32.totalorder %s72, 0
    %s75 = sadd.s32 %s74, 1
    %s76 = scalar_select %p73, %s74, %s75
    %p79 = pneg %p73
    %p80 = scmp.eq.s32.totalorder %s17, 1
    %p81 = por %p79, %p80
    %p82 = scmp.ne.s32.totalorder %s74, %s77
    %p83 = scmp.eq.s32.totalorder %s17, 0
    %p84 = por %p82, %p83
    %p85 = scmp.ne.s32.totalorder %s74, %s77
    %p86 = scmp.eq.s32.totalorder %s22, 1
    %p87 = por %p85, %p86
    %p88 = scmp.ne.s32.totalorder %s77, %s78
    %p89 = scmp.eq.s32.totalorder %s22, 0
    %p90 = por %p88, %p89
    %p91 = scmp.ne.s32.totalorder %s77, %s78
    %p92 = scmp.eq.s32.totalorder %s23, 1
    %p93 = por %p91, %p92
    %p95 = scmp.ne.s32.totalorder %s78, %s94
    %p96 = scmp.eq.s32.totalorder %s23, 0
    %p97 = por %p95, %p96
    %s98 = ssub.s32 %s17, %s24
    %p99 = scmp.eq.s32.totalorder %s98, 0
    %s101 = sadd.s32 %s100, 1
    %s102 = scalar_select %p99, %s100, %s101
    %p105 = pneg %p99
    %p106 = scmp.eq.s32.totalorder %s17, 1
    %p107 = por %p105, %p106
    %p108 = scmp.ne.s32.totalorder %s100, %s103
    %p109 = scmp.eq.s32.totalorder %s17, 0
    %p110 = por %p108, %p109
    %p111 = scmp.ne.s32.totalorder %s100, %s103
    %p112 = scmp.eq.s32.totalorder %s22, 1
    %p113 = por %p111, %p112
    %p114 = scmp.ne.s32.totalorder %s103, %s104
    %p115 = scmp.eq.s32.totalorder %s22, 0
    %p116 = por %p114, %p115
    %p117 = scmp.ne.s32.totalorder %s103, %s104
    %p118 = scmp.eq.s32.totalorder %s23, 1
    %p119 = por %p117, %p118
    %p121 = scmp.ne.s32.totalorder %s104, %s120
    %p122 = scmp.eq.s32.totalorder %s23, 0
    %p123 = por %p121, %p122
    %p124 = scmp.le.s32.totalorder 1, %s17
    %p125 = scmp.lt.s32.totalorder %s17, 3
    %p126 = pnand %p124, %p125
    %p127 = pneg %p126
    // Predicated region
    $region9: #{tpu_custom_call.1} parent=5 // pred_check
      _
    $region10: #{tpu_custom_call.1} parent=5 // pred_check_branch
      %129 = sbr.rel (%p126) target = $region12
    $region11: #{tpu_custom_call.1} parent=5 // pred_region
      %s130 = ssub.s32 %s17, 1
      // Predicated region
      $region13: #{tpu_custom_call.1} parent=11 // pred_check
        %p131 = pneg %p38
      $region14: #{tpu_custom_call.1} parent=11 // pred_check_branch
        %133 = sbr.rel (%p131) target = $region16
      $region15: #{tpu_custom_call.1} parent=11 // pred_region
        _
      $region16: #{tpu_custom_call.1} parent=11 // pred_fallthru
        _
    $region12: #{tpu_custom_call.1} parent=5 // pred_fallthru
      _
    %p134 = scmp.lt.s32.totalorder %s17, 2
    // Predicated region
    $region17: #{tpu_custom_call.1} parent=5 // pred_check
      %p135 = pneg %p134
    $region18: #{tpu_custom_call.1} parent=5 // pred_check_branch
      %137 = sbr.rel (%p135) target = $region20
    $region19: #{tpu_custom_call.1} parent=5 // pred_region
      // Predicated region
      $region21: #{tpu_custom_call.1} parent=19 // pred_check
        %p138 = pneg %p58
      $region22: #{tpu_custom_call.1} parent=19 // pred_check_branch
        %140 = sbr.rel (%p138) target = $region24
      $region23: #{tpu_custom_call.1} parent=19 // pred_region
        %p141 = scmp.lt.s32.totalorder %s17, 1
        %s142 = scalar_select %p141, %s17, 1
        %s143 = smul.addr %s142, 6
        %s144 = smul.addr %s143, 8
        %s145 = scalar_lea.vmem %s2, %s144
      $region24: #{tpu_custom_call.1} parent=19 // pred_fallthru
        _
    $region20: #{tpu_custom_call.1} parent=5 // pred_fallthru
      _
    %p146 = scmp.le.s32.totalorder 1, %s17
    %p147 = scmp.lt.s32.totalorder %s17, 3
    %p148 = pnand %p146, %p147
    %p149 = pneg %p148
    // Predicated region
    $region25: #{tpu_custom_call.1} parent=5 // pred_check
      _
    $region26: #{tpu_custom_call.1} parent=5 // pred_check_branch
      %151 = sbr.rel (%p148) target = $region28
    $region27: #{tpu_custom_call.1} parent=5 // pred_region
      %s152 = ssub.s32 %s17, 1
      %p153 = pneg %p38
      %p154 = pneg %p35
      %p155 = scmp.lt.s32.totalorder %s22, 1
      %s156 = scalar_select %p155, %s22, 1
      %s157 = smul.addr %s156, 6
      %s158 = smul.addr %s157, 8
      %s159 = scalar_lea.vmem %s2, %s158
      %p160 = pneg %p64
      %p161 = pneg %p61
      %p162 = pneg %p90
      %p163 = pneg %p87
      %p164 = scmp.lt.s32.totalorder %s22, 1
      %s165 = scalar_select %p164, %s22, 1
      %s166 = smul.addr %s165, 6
      %s167 = smul.addr %s166, 8
      %s168 = scalar_lea.vmem %s3, %s167
      %p169 = pneg %p116
      %p170 = pneg %p113
      %p171 = scmp.lt.s32.totalorder %s22, 1
      %s172 = scalar_select %p171, %s22, 1
      %s173 = smul.addr %s172, 6
      %s174 = smul.addr %s173, 8
      %s175 = scalar_lea.vmem %s4, %s174
      %p176 = scmp.lt.s32.totalorder %s22, 1
      %s177 = scalar_select %p176, %s22, 1
      %s178 = smul.addr %s177, 6
      %s179 = smul.addr %s178, 8
      %s180 = scalar_lea.vmem %s2, %s179
      %p181 = scmp.lt.s32.totalorder %s22, 1
      %s182 = scalar_select %p181, %s22, 1
      %s183 = smul.addr %s182, 6
      %s184 = smul.addr %s183, 8
      %s185 = scalar_lea.vmem %s3, %s184
      %p186 = scmp.lt.s32.totalorder %s22, 1
      %s187 = scalar_select %p186, %s22, 1
      %s188 = smul.addr %s187, 6
      %s189 = smul.addr %s188, 8
      %s190 = scalar_lea.vmem %s4, %s189
      %s191 = sld [smem:[#allocation3]]
      %p192 = scmp.eq.s32.totalorder %s191, 1
      %v193 = vld [vmem:[%s1] sm:$0xff]
      %v194 = vld [vmem:[%s1 + $0x8] sm:$0xff]
      %v195 = vld [vmem:[%s180] sm:$0xff]
      %v196 = vld [vmem:[%s180 + $0x8] sm:$0xff]
      %v197 = vld [vmem:[%s180 + $0x10] sm:$0xff]
      %v198 = vld [vmem:[%s180 + $0x18] sm:$0xff]
      %v199 = vld [vmem:[%s180 + $0x20] sm:$0xff]
      %v200 = vld [vmem:[%s180 + $0x28] sm:$0xff]
      %vm201 = vcmask 130048
      %v203 = vsel %vm201, %v195, 0
      %v206 = vsel %vm201, %v196, 0
      %v209 = vsel %vm201, %v197, 0
      %v212 = vsel %vm201, %v198, 0
      %v215 = vsel %vm201, %v199, 0
      %v218 = vsel %vm201, %v200, 0
      %220 = vmatprep.subr.mxu0 0.0
      %221 = vmatpush1.msra.mxu0 %v193
      %222 = vmatprep.subr.mxu0 0.0
      %223 = vmatpush1.msra.mxu0 %v194
      %224 = vmatprep.subr.mxu0 0.0
      %225 = vmatpush1.msra.mxu0 0.0
      %226 = vmatprep.subr.mxu0 0.0
      %227 = vmatpush1.msra.mxu0 0.0
      %228 = vmatprep.subr.mxu0 0.0
      %229 = vmatpush1.msra.mxu0 0.0
      %230 = vmatprep.subr.mxu0 0.0
      %231 = vmatpush1.msra.mxu0 0.0
      %232 = vmatprep.subr.mxu0 0.0
      %233 = vmatpush1.msra.mxu0 0.0
      %234 = vmatprep.subr.mxu0 0.0
      %235 = vmatpush1.msra.mxu0 0.0
      %236 = vmatprep.subr.mxu0 0.0
      %237 = vmatpush1.msra.mxu0 0.0
      %238 = vmatprep.subr.mxu0 0.0
      %239 = vmatpush1.msra.mxu0 0.0
      %240 = vmatprep.subr.mxu0 0.0
      %241 = vmatpush1.msra.mxu0 0.0
      %242 = vmatprep.subr.mxu0 0.0
      %243 = vmatpush1.msra.mxu0 0.0
      %244 = vmatprep.subr.mxu0 0.0
      %245 = vmatpush1.msra.mxu0 0.0
      %246 = vmatprep.subr.mxu0 0.0
      %247 = vmatpush1.msra.mxu0 0.0
      %248 = vmatprep.subr.mxu0 0.0
      %249 = vmatpush1.msra.mxu0 0.0
      %250 = vmatprep.subr.mxu0 0.0
      %251 = vmatpush1.msra.mxu0 0.0
      %252 = vmatprep.subr.mxu0 0.0
      %253 = vmatpush1.msra.mxu0 0.0
      %254 = vmatprep.subr.mxu0 0.0
      %255 = vmatpush1.msra.mxu0 0.0
      %256 = vmatprep.subr.mxu0 0.0
      %257 = vmatpush1.msra.mxu0 0.0
      %258 = vmatprep.subr.mxu0 0.0
      %259 = vmatpush1.msra.mxu0 0.0
      %260 = vmatprep.subr.mxu0 0.0
      %261 = vmatpush1.msra.mxu0 0.0
      %262 = vmatprep.subr.mxu0 0.0
      %263 = vmatpush1.msra.mxu0 0.0
      %264 = vmatprep.subr.mxu0 0.0
      %265 = vmatpush1.msra.mxu0 0.0
      %266 = vmatprep.subr.mxu0 0.0
      %267 = vmatpush1.msra.mxu0 0.0
      %268 = vmatprep.subr.mxu0 0.0
      %269 = vmatpush1.msra.mxu0 0.0
      %270 = vmatprep.subr.mxu0 0.0
      %271 = vmatpush1.msra.mxu0 0.0
      %272 = vmatprep.subr.mxu0 0.0
      %273 = vmatpush1.msra.mxu0 0.0
      %274 = vmatprep.subr.mxu0 0.0
      %275 = vmatpush1.msra.mxu0 0.0
      %276 = vmatprep.subr.mxu0 0.0
      %277 = vmatpush1.msra.mxu0 0.0
      %278 = vmatprep.subr.mxu0 0.0
      %279 = vmatpush1.msra.mxu0 0.0
      %280 = vmatprep.subr.mxu0 0.0
      %281 = vmatpush1.msra.mxu0 0.0
      %282 = vmatprep.subr.mxu0 0.0
      %283 = vmatpush1.msra.mxu0 0.0
      %284 = vmatprep.mubr.f32.mxu0 0.0
      %285 = vmatmul.mubr.f32.gmra.mrb[0].mxu0 %v203
      %v286 = vpop.f32.mrb[0].mxu0
      %v287 = vadd.f32 0.0, %v286
      %v288 = vpop.f32.mrb[0].mxu0
      %289 = vmatprep.mubr.f32.mxu0 0.0
      %290 = vmatmul.mubr.f32.gmra.mrb[0].mxu0 %v206
      %v291 = vpop.f32.mrb[0].mxu0
      %v292 = vadd.f32 0.0, %v291
      %v293 = vpop.f32.mrb[0].mxu0
      %294 = vmatprep.mubr.f32.mxu0 0.0
      %295 = vmatmul.mubr.f32.gmra.mrb[0].mxu0 %v209
      %v296 = vpop.f32.mrb[0].mxu0
      %v297 = vadd.f32 0.0, %v296
      %v298 = vpop.f32.mrb[0].mxu0
      %299 = vmatprep.mubr.f32.mxu0 0.0
      %300 = vmatmul.mubr.f32.gmra.mrb[0].mxu0 %v212
      %v301 = vpop.f32.mrb[0].mxu0
      %v302 = vadd.f32 0.0, %v301
      %v303 = vpop.f32.mrb[0].mxu0
      %304 = vmatprep.mubr.f32.mxu0 0.0
      %305 = vmatmul.mubr.f32.gmra.mrb[0].mxu0 %v215
      %v306 = vpop.f32.mrb[0].mxu0
      %v307 = vadd.f32 0.0, %v306
      %v308 = vpop.f32.mrb[0].mxu0
      %309 = vmatprep.mubr.f32.mxu0 0.0
      %310 = vmatmul.mubr.f32.gmra.mrb[0].mxu0 %v218
      %v311 = vpop.f32.mrb[0].mxu0
      %v312 = vadd.f32 0.0, %v311
      %v313 = vpop.f32.mrb[0].mxu0
      %314 = vdwg.mxu0
      %v315 = vmul.f32 %v287, 0.299
      %v316 = vmul.f32 %v292, 0.299
      %v317 = vmul.f32 %v297, 0.587
      %v318 = vmul.f32 %v302, 0.587
      %v319 = vadd.f32 %v315, %v317
      %v320 = vadd.f32 %v316, %v318
      %v321 = vmul.f32 %v307, 0.114
      %v322 = vmul.f32 %v312, 0.114
      %v323 = vadd.f32 %v319, %v321
      %v324 = vadd.f32 %v320, %v322
      %s325 = scalar_select %p192, 1, 0
      %v326 = vstv %s325
      %vm327 = vcmp.eq.s32.totalorder %v326, 1
      %v328 = vsel %vm327, %v323, %v287
      %v329 = vsel %vm327, %v324, %v292
      %v330 = vsub.f32 %v328, 0.485
      %v331 = vsub.f32 %v329, 0.485
      %v332 = vmul.f32 %v330, 4.366812
      %v333 = vmul.f32 %v331, 4.366812
      %334 = vst.msk [vmem:[%s185] sm:$0xff] %vm201, %v332
      %335 = vst.msk [vmem:[%s185 + $0x8] sm:$0xff] %vm201, %v333
      %v336 = vsel %vm327, %v323, %v297
      %v337 = vsel %vm327, %v324, %v302
      %v338 = vsub.f32 %v336, 0.456
      %v339 = vsub.f32 %v337, 0.456
      %v340 = vmul.f32 %v338, 4.464286
      %v341 = vmul.f32 %v339, 4.464286
      %342 = vst.msk [vmem:[%s185 + $0x10] sm:$0xff] %vm201, %v340
      %343 = vst.msk [vmem:[%s185 + $0x18] sm:$0xff] %vm201, %v341
      %v344 = vsel %vm327, %v323, %v307
      %v345 = vsel %vm327, %v324, %v312
      %v346 = vsub.f32 %v344, 0.406
      %v347 = vsub.f32 %v345, 0.406
      %v348 = vmul.f32 %v346, 4.4444447
      %v349 = vmul.f32 %v347, 4.4444447
      %350 = vst.msk [vmem:[%s185 + $0x20] sm:$0xff] %vm201, %v348
      %351 = vst.msk [vmem:[%s185 + $0x28] sm:$0xff] %vm201, %v349
      %s352 = sld [smem:[#allocation3 + $0x1]]
      %p353 = scmp.eq.s32.totalorder %s352, 1
      %s354 = scalar_lea.vmem %s1, 16
      %v355 = vld [vmem:[%s354] sm:$0xff]
      %v356 = vld [vmem:[%s354 + $0x8] sm:$0xff]
      %v357 = vld [vmem:[%s180] sm:$0xff]
      %v358 = vld [vmem:[%s180 + $0x8] sm:$0xff]
      %v359 = vld [vmem:[%s180 + $0x10] sm:$0xff]
      %v360 = vld [vmem:[%s180 + $0x18] sm:$0xff]
      %v361 = vld [vmem:[%s180 + $0x20] sm:$0xff]
      %v362 = vld [vmem:[%s180 + $0x28] sm:$0xff]
      %v364 = vsel %vm201, %v357, 0
      %v367 = vsel %vm201, %v358, 0
      %v370 = vsel %vm201, %v359, 0
      %v373 = vsel %vm201, %v360, 0
      %v376 = vsel %vm201, %v361, 0
      %v379 = vsel %vm201, %v362, 0
      %381 = vmatprep.subr.mxu0 0.0
      %382 = vmatpush1.msra.mxu0 %v355
      %383 = vmatprep.subr.mxu0 0.0
      %384 = vmatpush1.msra.mxu0 %v356
      %385 = vmatprep.subr.mxu0 0.0
      %386 = vmatpush1.msra.mxu0 0.0
      %387 = vmatprep.subr.mxu0 0.0
      %388 = vmatpush1.msra.mxu0 0.0
      %389 = vmatprep.subr.mxu0 0.0
      %390 = vmatpush1.msra.mxu0 0.0
      %391 = vmatprep.subr.mxu0 0.0
      %392 = vmatpush1.msra.mxu0 0.0
      %393 = vmatprep.subr.mxu0 0.0
      %394 = vmatpush1.msra.mxu0 0.0
      %395 = vmatprep.subr.mxu0 0.0
      %396 = vmatpush1.msra.mxu0 0.0
      %397 = vmatprep.subr.mxu0 0.0
      %398 = vmatpush1.msra.mxu0 0.0
      %399 = vmatprep.subr.mxu0 0.0
      %400 = vmatpush1.msra.mxu0 0.0
      %401 = vmatprep.subr.mxu0 0.0
      %402 = vmatpush1.msra.mxu0 0.0
      %403 = vmatprep.subr.mxu0 0.0
      %404 = vmatpush1.msra.mxu0 0.0
      %405 = vmatprep.subr.mxu0 0.0
      %406 = vmatpush1.msra.mxu0 0.0
      %407 = vmatprep.subr.mxu0 0.0
      %408 = vmatpush1.msra.mxu0 0.0
      %409 = vmatprep.subr.mxu0 0.0
      %410 = vmatpush1.msra.mxu0 0.0
      %411 = vmatprep.subr.mxu0 0.0
      %412 = vmatpush1.msra.mxu0 0.0
      %413 = vmatprep.subr.mxu0 0.0
      %414 = vmatpush1.msra.mxu0 0.0
      %415 = vmatprep.subr.mxu0 0.0
      %416 = vmatpush1.msra.mxu0 0.0
      %417 = vmatprep.subr.mxu0 0.0
      %418 = vmatpush1.msra.mxu0 0.0
      %419 = vmatprep.subr.mxu0 0.0
      %420 = vmatpush1.msra.mxu0 0.0
      %421 = vmatprep.subr.mxu0 0.0
      %422 = vmatpush1.msra.mxu0 0.0
      %423 = vmatprep.subr.mxu0 0.0
      %424 = vmatpush1.msra.mxu0 0.0
      %425 = vmatprep.subr.mxu0 0.0
      %426 = vmatpush1.msra.mxu0 0.0
      %427 = vmatprep.subr.mxu0 0.0
      %428 = vmatpush1.msra.mxu0 0.0
      %429 = vmatprep.subr.mxu0 0.0
      %430 = vmatpush1.msra.mxu0 0.0
      %431 = vmatprep.subr.mxu0 0.0
      %432 = vmatpush1.msra.mxu0 0.0
      %433 = vmatprep.subr.mxu0 0.0
      %434 = vmatpush1.msra.mxu0 0.0
      %435 = vmatprep.subr.mxu0 0.0
      %436 = vmatpush1.msra.mxu0 0.0
      %437 = vmatprep.subr.mxu0 0.0
      %438 = vmatpush1.msra.mxu0 0.0
      %439 = vmatprep.subr.mxu0 0.0
      %440 = vmatpush1.msra.mxu0 0.0
      %441 = vmatprep.subr.mxu0 0.0
      %442 = vmatpush1.msra.mxu0 0.0
      %443 = vmatprep.subr.mxu0 0.0
      %444 = vmatpush1.msra.mxu0 0.0
      %445 = vmatprep.mubr.f32.mxu0 0.0
      %446 = vmatmul.mubr.f32.gmra.mrb[0].mxu0 %v364
      %v447 = vpop.f32.mrb[0].mxu0
      %v448 = vadd.f32 0.0, %v447
      %v449 = vpop.f32.mrb[0].mxu0
      %450 = vmatprep.mubr.f32.mxu0 0.0
      %451 = vmatmul.mubr.f32.gmra.mrb[0].mxu0 %v367
      %v452 = vpop.f32.mrb[0].mxu0
      %v453 = vadd.f32 0.0, %v452
      %v454 = vpop.f32.mrb[0].mxu0
      %455 = vmatprep.mubr.f32.mxu0 0.0
      %456 = vmatmul.mubr.f32.gmra.mrb[0].mxu0 %v370
      %v457 = vpop.f32.mrb[0].mxu0
      %v458 = vadd.f32 0.0, %v457
      %v459 = vpop.f32.mrb[0].mxu0
      %460 = vmatprep.mubr.f32.mxu0 0.0
      %461 = vmatmul.mubr.f32.gmra.mrb[0].mxu0 %v373
      %v462 = vpop.f32.mrb[0].mxu0
      %v463 = vadd.f32 0.0, %v462
      %v464 = vpop.f32.mrb[0].mxu0
      %465 = vmatprep.mubr.f32.mxu0 0.0
      %466 = vmatmul.mubr.f32.gmra.mrb[0].mxu0 %v376
      %v467 = vpop.f32.mrb[0].mxu0
      %v468 = vadd.f32 0.0, %v467
      %v469 = vpop.f32.mrb[0].mxu0
      %470 = vmatprep.mubr.f32.mxu0 0.0
      %471 = vmatmul.mubr.f32.gmra.mrb[0].mxu0 %v379
      %v472 = vpop.f32.mrb[0].mxu0
      %v473 = vadd.f32 0.0, %v472
      %v474 = vpop.f32.mrb[0].mxu0
      %475 = vdwg.mxu0
      %v476 = vmul.f32 %v448, 0.299
      %v477 = vmul.f32 %v453, 0.299
      %v478 = vmul.f32 %v458, 0.587
      %v479 = vmul.f32 %v463, 0.587
      %v480 = vadd.f32 %v476, %v478
      %v481 = vadd.f32 %v477, %v479
      %v482 = vmul.f32 %v468, 0.114
      %v483 = vmul.f32 %v473, 0.114
      %v484 = vadd.f32 %v480, %v482
      %v485 = vadd.f32 %v481, %v483
      %s486 = scalar_select %p353, 1, 0
      %v487 = vstv %s486
      %vm488 = vcmp.eq.s32.totalorder %v487, 1
      %v489 = vsel %vm488, %v484, %v448
      %v490 = vsel %vm488, %v485, %v453
      %v491 = vsub.f32 %v489, 0.485
      %v492 = vsub.f32 %v490, 0.485
      %v493 = vmul.f32 %v491, 4.366812
      %v494 = vmul.f32 %v492, 4.366812
      %495 = vst.msk [vmem:[%s190] sm:$0xff] %vm201, %v493
      %496 = vst.msk [vmem:[%s190 + $0x8] sm:$0xff] %vm201, %v494
      %v497 = vsel %vm488, %v484, %v458
      %v498 = vsel %vm488, %v485, %v463
      %v499 = vsub.f32 %v497, 0.456
      %v500 = vsub.f32 %v498, 0.456
      %v501 = vmul.f32 %v499, 4.464286
      %v502 = vmul.f32 %v500, 4.464286
      %503 = vst.msk [vmem:[%s190 + $0x10] sm:$0xff] %vm201, %v501
      %504 = vst.msk [vmem:[%s190 + $0x18] sm:$0xff] %vm201, %v502
      %v505 = vsel %vm488, %v484, %v468
      %v506 = vsel %vm488, %v485, %v473
      %v507 = vsub.f32 %v505, 0.406
      %v508 = vsub.f32 %v506, 0.406
      %v509 = vmul.f32 %v507, 4.4444447
      %v510 = vmul.f32 %v508, 4.4444447
      %511 = vst.msk [vmem:[%s190 + $0x20] sm:$0xff] %vm201, %v509
      %512 = vst.msk [vmem:[%s190 + $0x28] sm:$0xff] %vm201, %v510
      %p513 = scmp.lt.s32.totalorder %s22, 1
      %s514 = scalar_select %p513, %s22, 1
      %s515 = smul.addr %s514, 6
      %s516 = smul.addr %s515, 8
      %s517 = scalar_lea.vmem %s3, %s516
      %p518 = scmp.lt.s32.totalorder %s22, 1
      %s519 = scalar_select %p518, %s22, 1
      %s520 = smul.addr %s519, 6
      %s521 = smul.addr %s520, 8
      %s522 = scalar_lea.vmem %s4, %s521
      // Predicated region
      $region29: #{tpu_custom_call.1} parent=27 // pred_check
        %p523 = pneg %p87
      $region30: #{tpu_custom_call.1} parent=27 // pred_check_branch
        %525 = sbr.rel (%p523) target = $region32
      $region31: #{tpu_custom_call.1} parent=27 // pred_region
        _
      $region32: #{tpu_custom_call.1} parent=27 // pred_fallthru
        _
      // Predicated region
      $region33: #{tpu_custom_call.1} parent=27 // pred_check
        %p526 = pneg %p113
      $region34: #{tpu_custom_call.1} parent=27 // pred_check_branch
        %528 = sbr.rel (%p526) target = $region36
      $region35: #{tpu_custom_call.1} parent=27 // pred_region
        _
      $region36: #{tpu_custom_call.1} parent=27 // pred_fallthru
        _
    $region28: #{tpu_custom_call.1} parent=5 // pred_fallthru
      _
    %p529 = scmp.le.s32.totalorder 2, %s17
    // Predicated region
    $region37: #{tpu_custom_call.1} parent=5 // pred_check
      %p530 = pneg %p529
    $region38: #{tpu_custom_call.1} parent=5 // pred_check_branch
      %532 = sbr.rel (%p530) target = $region40
    $region39: #{tpu_custom_call.1} parent=5 // pred_region
      %s533 = ssub.s32 %s17, 2
      // Predicated region
      $region41: #{tpu_custom_call.1} parent=39 // pred_check
        %p534 = pneg %p93
      $region42: #{tpu_custom_call.1} parent=39 // pred_check_branch
        %536 = sbr.rel (%p534) target = $region44
      $region43: #{tpu_custom_call.1} parent=39 // pred_region
        %p537 = scmp.lt.s32.totalorder %s23, 1
        %s538 = scalar_select %p537, %s23, 1
        %s539 = smul.addr %s538, 6
        %s540 = smul.addr %s539, 8
        %s541 = scalar_lea.vmem %s3, %s540
      $region44: #{tpu_custom_call.1} parent=39 // pred_fallthru
        _
      // Predicated region
      $region45: #{tpu_custom_call.1} parent=39 // pred_check
        %p542 = pneg %p119
      $region46: #{tpu_custom_call.1} parent=39 // pred_check_branch
        %544 = sbr.rel (%p542) target = $region48
      $region47: #{tpu_custom_call.1} parent=39 // pred_region
        %p545 = scmp.lt.s32.totalorder %s23, 1
        %s546 = scalar_select %p545, %s23, 1
        %s547 = smul.addr %s546, 6
        %s548 = smul.addr %s547, 8
        %s549 = scalar_lea.vmem %s4, %s548
      $region48: #{tpu_custom_call.1} parent=39 // pred_fallthru
        _
    $region40: #{tpu_custom_call.1} parent=5 // pred_fallthru
      _
  $region6: #{tpu_custom_call.1} parent=0 // loop_footer
    %s21 = sadd.s32 1, %s17
  $region7: #{tpu_custom_call.1} parent=0 // loop_footer_branch
    %16 = sbr.rel target = $region3
  $region8: #{tpu_custom_call.1} parent=0 // loop_exit
    _

</llo_original>
